<compile_context>
chip_gen: v7x
topology: tpu7x:2x2x1
jax: 0.10.0
libtpu: 0.0.40
codegen_flags: <defaults>
</compile_context>

<pallas_src>
from functools import partial

import numpy as np
import jax
import jax.numpy as jnp
from jax import lax
from jax.experimental import pallas as pl
from jax.experimental.pallas import tpu as pltpu


def _round_up(x, m):
    return ((x + m - 1) // m) * m


# ---------------------------------------------------------------------------
# Setup-time (hoisted, numpy) construction of the gate unitary.
# ---------------------------------------------------------------------------
def hadamard_matrix(dim, inverse=False):
    omega = np.exp(2j * np.pi / dim)
    M = np.ones((dim, dim), dtype=np.complex128)
    for i in range(1, dim):
        for j in range(1, dim):
            M[i, j] = omega ** (j * i)
    M = M / dim ** 0.5
    if inverse:
        M = np.conj(M).T
    return M.astype(np.complex64)


def hadamard_unitary(dim, wires, index=(0,), inverse=False):
    """U = kron_i (M if i in index else I_dim)  (numpy complex64)."""
    M = hadamard_matrix(dim, inverse)
    I = np.eye(dim, dtype=np.complex64)
    U = np.eye(1, dtype=np.complex64)
    for i in range(wires):
        U = np.kron(U, M if i in index else I)
    return U


def build_hadamard_operator(dim, wires, index=(0,), inverse=False, *,
                            bm=512, bk=512, compute_dtype=jnp.float32):
    """Hoisted constant work: build U, zero-pad to tile multiples, and fuse
    [Ur | Ui] interleaved per bk-block along the contraction axis.

    compute_dtype may be set to jnp.bfloat16 (opt-in) — accumulation stays f32.
    """
    D = dim ** wires
    Uc = hadamard_unitary(dim, wires, index, inverse)
    Ur = np.ascontiguousarray(Uc.real, dtype=np.float32)
    Ui = np.ascontiguousarray(Uc.imag, dtype=np.float32)

    Dp8 = _round_up(D, 8)
    bm_e = min(bm, Dp8)
    # Keep >= 2 blocks on the "parallel" M axis for largish D so both v7x
    # TensorCores get work even when D <= bm.
    if bm_e == Dp8 and Dp8 >= 256:
        bm_e = _round_up((Dp8 + 1) // 2, 8)
    bk_e = min(bk, _round_up(D, 128))
    Mp = _round_up(D, bm_e)
    Kp = _round_up(D, bk_e)

    Urp = np.zeros((Mp, Kp), np.float32)
    Uip = np.zeros((Mp, Kp), np.float32)
    Urp[:D, :D] = Ur
    Uip[:D, :D] = Ui

    # Interleave per contraction block: cols [Ur_blk0 | Ui_blk0 | Ur_blk1 | ...]
    nk = Kp // bk_e
    lhs = np.stack([Urp.reshape(Mp, nk, bk_e),
                    Uip.reshape(Mp, nk, bk_e)], axis=2).reshape(Mp, 2 * Kp)

    return dict(lhs=jnp.asarray(lhs, dtype=compute_dtype),
                D=D, Mp=Mp, Kp=Kp, bm=bm_e, bk=bk_e)


# ---------------------------------------------------------------------------
# Pallas kernel: one fused real MXU matmul per (i, j, k) grid step.
#   lhs block : (bm, 2*bk)  = [Ur_k | Ui_k]
#   x1  block : (bk, n)     = [Re-chunk | Im-chunk]     (n = 2 * half)
#   y   block : (bm, n)     = [Yr-chunk | Yi-chunk]     (f32, accumulated over k)
# ---------------------------------------------------------------------------
def hadamard_kernel(lhs_ref, x1_ref, y_ref):
    @pl.when(pl.program_id(2) == 0)
    def _():
        y_ref[...] = jnp.zeros_like(y_ref)

    x1 = x1_ref[...]
    n = x1.shape[-1]
    half = n // 2
    # X2 = [-Im | Re]: swap the two lane halves (XLU roll by n/2, direction
    # irrelevant for a half-width shift) and negate the first half (VPU).
    swapped = pltpu.roll(x1, shift=half, axis=1)
    lane = lax.broadcasted_iota(jnp.int32, x1.shape, 1)
    x2 = jnp.where(lane < half, -swapped, swapped)
    rhs = jnp.concatenate([x1, x2], axis=0)            # (2*bk, n)
    y_ref[...] += jnp.dot(lhs_ref[...], rhs, preferred_element_type=jnp.float32)


@partial(jax.jit, static_argnames=("D", "Mp", "Kp", "bm", "bk", "bn"))
def _hadamard_apply(lhs, x, *, D, Mp, Kp, bm, bk, bn):
    squeeze = (x.ndim == 1)
    if squeeze:
        x = x[:, None]
    assert x.shape[0] == D, "state length must equal dim**wires used at setup"
    B = x.shape[1]
    cdtype = lhs.dtype
    xr = jnp.real(x).astype(cdtype)
    xi = jnp.imag(x).astype(cdtype)

    small = (2 * B <= 128)
    if small:
        # Single 128-lane slab: Re at lanes [0,B), Im at lanes [64, 64+B).
        half = 64
        nb = 1
        bn_e = 128
        x1 = (jnp.zeros((Kp, 128), cdtype)
              .at[:D, :B].set(xr)
              .at[:D, 64:64 + B].set(xi))
    else:
        halfN = _round_up(B, 128)
        # Chunk width: 128-multiple divisor of halfN, at most bn // 2.
        half = min(max(bn // 2, 128), halfN)
        half = (half // 128) * 128
        while halfN % half:
            half -= 128
        nb = halfN // half
        bn_e = 2 * half
        xr_p = jnp.zeros((Kp, halfN), cdtype).at[:D, :B].set(xr)
        xi_p = jnp.zeros((Kp, halfN), cdtype).at[:D, :B].set(xi)
        # Interleave Re/Im in `half`-wide chunks so each lane block is
        # self-contained for the in-kernel swap.
        x1 = jnp.stack([xr_p.reshape(Kp, nb, half),
                        xi_p.reshape(Kp, nb, half)], axis=2).reshape(Kp, 2 * halfN)

    Np = x1.shape[1]
    grid = (Mp // bm, Np // bn_e, Kp // bk)

    yp = pl.pallas_call(
        hadamard_kernel,
        out_shape=jax.ShapeDtypeStruct((Mp, Np), jnp.float32),
        grid_spec=pltpu.PrefetchScalarGridSpec(
            num_scalar_prefetch=0,
            grid=grid,
            in_specs=[
                pl.BlockSpec((bm, 2 * bk), lambda i, j, k: (i, k)),
                pl.BlockSpec((bk, bn_e), lambda i, j, k: (k, j)),
            ],
            out_specs=pl.BlockSpec((bm, bn_e), lambda i, j, k: (i, j)),
        ),
        compiler_params=pltpu.CompilerParams(
            dimension_semantics=("parallel", "parallel", "arbitrary"),
            vmem_limit_bytes=48 * 1024 * 1024),
    )(lhs, x1)

    if small:
        yr = yp[:D, :B]
        yi = yp[:D, 64:64 + B]
    else:
        ys = yp[:D].reshape(D, nb, 2, half)
        yr = ys[:, :, 0, :].reshape(D, nb * half)[:, :B]
        yi = ys[:, :, 1, :].reshape(D, nb * half)[:, :B]
    y = lax.complex(yr, yi)
    return y[:, 0] if squeeze else y


def hadamard_apply(op, x, *, bn=512):
    """Apply the hoisted Hadamard gate operator to state(s) x: returns U @ x."""
    return _hadamard_apply(op["lhs"], x, D=op["D"], Mp=op["Mp"], Kp=op["Kp"],
                           bm=op["bm"], bk=op["bk"], bn=bn)


if __name__ == "__main__":
    # Qutrits (dim=3), 4 wires -> D = 81; Hadamard on qudits 0 and 2; batch 8.
    dim, wires, index = 3, 4, (0, 2)
    D = dim ** wires
    B = 8

    op = build_hadamard_operator(dim, wires, index=index, inverse=False)

    key = jax.random.PRNGKey(0)
    kr, ki = jax.random.split(key)
    x = lax.complex(jax.random.normal(kr, (D, B), dtype=jnp.float32),
                    jax.random.normal(ki, (D, B), dtype=jnp.float32))

    y = hadamard_apply(op, x)
    y = jax.block_until_ready(y)

    # Reference: the module's forward semantics, U @ x in complex64.
    U = jnp.asarray(hadamard_unitary(dim, wires, index, inverse=False))
    y_ref = U @ x
    np.testing.assert_allclose(np.asarray(y), np.asarray(y_ref),
                               rtol=1e-4, atol=1e-5)

    print("KERNEL_OK")
</pallas_src>

<mosaic_0001>
module attributes {stable_mosaic.version = 11 : i64} {
  func.func @hadamard_kernel(%arg0: i32, %arg1: i32, %arg2: i32, %arg3: memref<88x256xf32, #tpu.memory_space<vmem>>, %arg4: memref<128x128xf32, #tpu.memory_space<vmem>>, %arg5: memref<88x128xf32, #tpu.memory_space<vmem>>) attributes {dimension_semantics = [#tpu.dimension_semantics<parallel>, #tpu.dimension_semantics<parallel>, #tpu.dimension_semantics<arbitrary>], iteration_bounds = array<i64: 1, 1, 1>, scalar_prefetch = 0 : i64, scratch_operands = 0 : i64, tpu.core_type = #tpu.core_type<tc>, window_params = [{transform_indices = @transform_0, window_bounds = array<i64: 88, 256>}, {transform_indices = @transform_1, window_bounds = array<i64: 128, 128>}, {transform_indices = @transform_2, window_bounds = array<i64: 88, 128>}]} {
    %c0_i32 = arith.constant 0 : i32
    %0 = arith.cmpi eq, %arg2, %c0_i32 : i32
    %1 = arith.extui %0 : i1 to i32
    %c0_i32_0 = arith.constant 0 : i32
    %2 = arith.cmpi ne, %1, %c0_i32_0 : i32
    scf.if %2 {
      %cst_10 = arith.constant 0.000000e+00 : f32
      %17 = vector.broadcast %cst_10 : f32 to vector<88x128xf32>
      %c0_11 = arith.constant 0 : index
      %c0_12 = arith.constant 0 : index
      %18 = vector.load %arg5[%c0_11, %c0_12] : memref<88x128xf32, #tpu.memory_space<vmem>>, vector<88x128xf32>
      tpu.vector_store %arg5[%c0_11, %c0_12], %17 {strides = array<i32>} : memref<88x128xf32, #tpu.memory_space<vmem>>, vector<88x128xf32>,
    } else {
    }
    %c0 = arith.constant 0 : index
    %c0_1 = arith.constant 0 : index
    %3 = vector.load %arg4[%c0, %c0_1] : memref<128x128xf32, #tpu.memory_space<vmem>>, vector<128x128xf32>
    %c64_i32 = arith.constant 64 : i32
    %4 = tpu.dynamic_rotate %3 by %c64_i32 dim 1 : vector<128x128xf32>, i32 -> vector<128x128xf32>
    %5 = tpu.iota {dimensions = array<i32: 1>} : vector<128x128xi32>
    %c64_i32_2 = arith.constant 64 : i32
    %6 = vector.broadcast %c64_i32_2 : i32 to vector<128x128xi32>
    %7 = arith.cmpi slt, %5, %6 : vector<128x128xi32>
    %cst = arith.constant 0.000000e+00 : f32
    %8 = vector.broadcast %cst : f32 to vector<128x128xf32>
    %9 = arith.subf %8, %4 : vector<128x128xf32>
    %10 = arith.select %7, %9, %4 : vector<128x128xi1>, vector<128x128xf32>
    %11 = tpu.concatenate %3, %10 in 0 : vector<128x128xf32>, vector<128x128xf32> -> vector<256x128xf32>
    %c0_3 = arith.constant 0 : index
    %c0_4 = arith.constant 0 : index
    %12 = vector.load %arg5[%c0_3, %c0_4] : memref<88x128xf32, #tpu.memory_space<vmem>>, vector<88x128xf32>
    %c0_5 = arith.constant 0 : index
    %c0_6 = arith.constant 0 : index
    %13 = vector.load %arg3[%c0_5, %c0_6] : memref<88x256xf32, #tpu.memory_space<vmem>>, vector<88x256xf32>
    %cst_7 = arith.constant dense<0.000000e+00> : vector<88x128xf32>
    %14 = tpu.matmul %13, %11, %cst_7 {dimension_numbers = #tpu.dot_dimension_numbers<[1], [0], [0], [1], [0, 0, 1, 1], [], []>} : vector<88x256xf32>, vector<256x128xf32>, vector<88x128xf32> -> vector<88x128xf32>
    %15 = arith.addf %12, %14 : vector<88x128xf32>
    %c0_8 = arith.constant 0 : index
    %c0_9 = arith.constant 0 : index
    %16 = vector.load %arg5[%c0_8, %c0_9] : memref<88x128xf32, #tpu.memory_space<vmem>>, vector<88x128xf32>
    tpu.vector_store %arg5[%c0_8, %c0_9], %15 {strides = array<i32>} : memref<88x128xf32, #tpu.memory_space<vmem>>, vector<88x128xf32>,
    return
  }
  func.func @transform_0(%arg0: i32, %arg1: i32, %arg2: i32) -> (i32, i32) {
    %c0_i32 = arith.constant 0 : i32
    return %arg0, %arg2 : i32, i32
  }
  func.func @transform_1(%arg0: i32, %arg1: i32, %arg2: i32) -> (i32, i32) {
    %c0_i32 = arith.constant 0 : i32
    return %arg2, %arg1 : i32, i32
  }
  func.func @transform_2(%arg0: i32, %arg1: i32, %arg2: i32) -> (i32, i32) {
    %c0_i32 = arith.constant 0 : i32
    return %arg0, %arg1 : i32, i32
  }
}

</mosaic_0001>

<llo_original>
// kernel: custom-call
$region0: #{custom-call}
  %s0 = inlined_call_operand.vmem [shape: c64[81,8], index: 0, kind: input, shape index: {}]
  %s1 = inlined_call_operand.vmem [shape: f32[81,8], index: 1, kind: output, shape index: {}]
  %v2 = vld [vmem:[%s0] sm:$0xff]
  %3 = vst [vmem:[%s1] sm:$0xff] %v2
  %s4 = scalar_lea.vmem %s1, 8
  %s5 = scalar_lea.vmem %s0, 8
  %v6 = vld [vmem:[%s5] sm:$0xff]
  %7 = vst [vmem:[%s4] sm:$0xff] %v6
  %s8 = scalar_lea.vmem %s1, 16
  %s9 = scalar_lea.vmem %s0, 16
  %v10 = vld [vmem:[%s9] sm:$0xff]
  %11 = vst [vmem:[%s8] sm:$0xff] %v10
  %s12 = scalar_lea.vmem %s1, 24
  %s13 = scalar_lea.vmem %s0, 24
  %v14 = vld [vmem:[%s13] sm:$0xff]
  %15 = vst [vmem:[%s12] sm:$0xff] %v14
  %s16 = scalar_lea.vmem %s1, 32
  %s17 = scalar_lea.vmem %s0, 32
  %v18 = vld [vmem:[%s17] sm:$0xff]
  %19 = vst [vmem:[%s16] sm:$0xff] %v18
  %s20 = scalar_lea.vmem %s1, 40
  %s21 = scalar_lea.vmem %s0, 40
  %v22 = vld [vmem:[%s21] sm:$0xff]
  %23 = vst [vmem:[%s20] sm:$0xff] %v22
  %s24 = scalar_lea.vmem %s1, 48
  %s25 = scalar_lea.vmem %s0, 48
  %v26 = vld [vmem:[%s25] sm:$0xff]
  %27 = vst [vmem:[%s24] sm:$0xff] %v26
  %s28 = scalar_lea.vmem %s1, 56
  %s29 = scalar_lea.vmem %s0, 56
  %v30 = vld [vmem:[%s29] sm:$0xff]
  %31 = vst [vmem:[%s28] sm:$0xff] %v30
  %s32 = scalar_lea.vmem %s1, 64
  %s33 = scalar_lea.vmem %s0, 64
  %v34 = vld [vmem:[%s33] sm:$0xff]
  %35 = vst [vmem:[%s32] sm:$0xff] %v34
  %s36 = scalar_lea.vmem %s1, 72
  %s37 = scalar_lea.vmem %s0, 72
  %v38 = vld [vmem:[%s37] sm:$0xff]
  %39 = vst [vmem:[%s36] sm:$0xff] %v38
  %s40 = scalar_lea.vmem %s1, 80
  %s41 = scalar_lea.vmem %s0, 80
  %v42 = vld [vmem:[%s41] sm:$0xff]
  %43 = vst [vmem:[%s40] sm:$0xff] %v42

// kernel: custom-call.1
$region0: #{custom-call.1}
  %s0 = inlined_call_operand.vmem [shape: c64[81,8], index: 0, kind: input, shape index: {}]
  %s1 = inlined_call_operand.vmem [shape: f32[81,8], index: 1, kind: output, shape index: {}]
  %s2 = scalar_lea.vmem %s0, 88
  %v3 = vld [vmem:[%s2] sm:$0xff]
  %4 = vst [vmem:[%s1] sm:$0xff] %v3
  %s5 = scalar_lea.vmem %s1, 8
  %s6 = scalar_lea.vmem %s2, 8
  %v7 = vld [vmem:[%s6] sm:$0xff]
  %8 = vst [vmem:[%s5] sm:$0xff] %v7
  %s9 = scalar_lea.vmem %s1, 16
  %s10 = scalar_lea.vmem %s2, 16
  %v11 = vld [vmem:[%s10] sm:$0xff]
  %12 = vst [vmem:[%s9] sm:$0xff] %v11
  %s13 = scalar_lea.vmem %s1, 24
  %s14 = scalar_lea.vmem %s2, 24
  %v15 = vld [vmem:[%s14] sm:$0xff]
  %16 = vst [vmem:[%s13] sm:$0xff] %v15
  %s17 = scalar_lea.vmem %s1, 32
  %s18 = scalar_lea.vmem %s2, 32
  %v19 = vld [vmem:[%s18] sm:$0xff]
  %20 = vst [vmem:[%s17] sm:$0xff] %v19
  %s21 = scalar_lea.vmem %s1, 40
  %s22 = scalar_lea.vmem %s2, 40
  %v23 = vld [vmem:[%s22] sm:$0xff]
  %24 = vst [vmem:[%s21] sm:$0xff] %v23
  %s25 = scalar_lea.vmem %s1, 48
  %s26 = scalar_lea.vmem %s2, 48
  %v27 = vld [vmem:[%s26] sm:$0xff]
  %28 = vst [vmem:[%s25] sm:$0xff] %v27
  %s29 = scalar_lea.vmem %s1, 56
  %s30 = scalar_lea.vmem %s2, 56
  %v31 = vld [vmem:[%s30] sm:$0xff]
  %32 = vst [vmem:[%s29] sm:$0xff] %v31
  %s33 = scalar_lea.vmem %s1, 64
  %s34 = scalar_lea.vmem %s2, 64
  %v35 = vld [vmem:[%s34] sm:$0xff]
  %36 = vst [vmem:[%s33] sm:$0xff] %v35
  %s37 = scalar_lea.vmem %s1, 72
  %s38 = scalar_lea.vmem %s2, 72
  %v39 = vld [vmem:[%s38] sm:$0xff]
  %40 = vst [vmem:[%s37] sm:$0xff] %v39
  %s41 = scalar_lea.vmem %s1, 80
  %s42 = scalar_lea.vmem %s2, 80
  %v43 = vld [vmem:[%s42] sm:$0xff]
  %44 = vst [vmem:[%s41] sm:$0xff] %v43

// kernel: custom-call.2
$region0: #{custom-call.2}
  %s0 = inlined_call_operand.vmem [shape: f32[81,8], index: 0, kind: input, shape index: {}]
  %s1 = inlined_call_operand.vmem [shape: f32[81,8], index: 1, kind: input, shape index: {}]
  %s2 = inlined_call_operand.vmem [shape: c64[81,8], index: 2, kind: output, shape index: {}]
  %s4 = scalar_lea.vmem %s2, 88
  %v5 = vld [vmem:[%s0] sm:$0xff]
  %6 = vst [vmem:[%s2] sm:$0xff] %v5
  %s7 = scalar_lea.vmem %s2, 8
  %s8 = scalar_lea.vmem %s0, 8
  %v9 = vld [vmem:[%s8] sm:$0xff]
  %10 = vst [vmem:[%s7] sm:$0xff] %v9
  %s11 = scalar_lea.vmem %s2, 16
  %s12 = scalar_lea.vmem %s0, 16
  %v13 = vld [vmem:[%s12] sm:$0xff]
  %14 = vst [vmem:[%s11] sm:$0xff] %v13
  %s15 = scalar_lea.vmem %s2, 24
  %s16 = scalar_lea.vmem %s0, 24
  %v17 = vld [vmem:[%s16] sm:$0xff]
  %18 = vst [vmem:[%s15] sm:$0xff] %v17
  %s19 = scalar_lea.vmem %s2, 32
  %s20 = scalar_lea.vmem %s0, 32
  %v21 = vld [vmem:[%s20] sm:$0xff]
  %22 = vst [vmem:[%s19] sm:$0xff] %v21
  %s23 = scalar_lea.vmem %s2, 40
  %s24 = scalar_lea.vmem %s0, 40
  %v25 = vld [vmem:[%s24] sm:$0xff]
  %26 = vst [vmem:[%s23] sm:$0xff] %v25
  %s27 = scalar_lea.vmem %s2, 48
  %s28 = scalar_lea.vmem %s0, 48
  %v29 = vld [vmem:[%s28] sm:$0xff]
  %30 = vst [vmem:[%s27] sm:$0xff] %v29
  %s31 = scalar_lea.vmem %s2, 56
  %s32 = scalar_lea.vmem %s0, 56
  %v33 = vld [vmem:[%s32] sm:$0xff]
  %34 = vst [vmem:[%s31] sm:$0xff] %v33
  %s35 = scalar_lea.vmem %s2, 64
  %s36 = scalar_lea.vmem %s0, 64
  %v37 = vld [vmem:[%s36] sm:$0xff]
  %38 = vst [vmem:[%s35] sm:$0xff] %v37
  %s39 = scalar_lea.vmem %s2, 72
  %s40 = scalar_lea.vmem %s0, 72
  %v41 = vld [vmem:[%s40] sm:$0xff]
  %42 = vst [vmem:[%s39] sm:$0xff] %v41
  %s43 = scalar_lea.vmem %s2, 80
  %s44 = scalar_lea.vmem %s0, 80
  %v45 = vld [vmem:[%s44] sm:$0xff]
  %46 = vst [vmem:[%s43] sm:$0xff] %v45
  %v47 = vld [vmem:[%s1] sm:$0xff]
  %48 = vst [vmem:[%s4] sm:$0xff] %v47
  %s49 = scalar_lea.vmem %s4, 8
  %s50 = scalar_lea.vmem %s1, 8
  %v51 = vld [vmem:[%s50] sm:$0xff]
  %52 = vst [vmem:[%s49] sm:$0xff] %v51
  %s53 = scalar_lea.vmem %s4, 16
  %s54 = scalar_lea.vmem %s1, 16
  %v55 = vld [vmem:[%s54] sm:$0xff]
  %56 = vst [vmem:[%s53] sm:$0xff] %v55
  %s57 = scalar_lea.vmem %s4, 24
  %s58 = scalar_lea.vmem %s1, 24
  %v59 = vld [vmem:[%s58] sm:$0xff]
  %60 = vst [vmem:[%s57] sm:$0xff] %v59
  %s61 = scalar_lea.vmem %s4, 32
  %s62 = scalar_lea.vmem %s1, 32
  %v63 = vld [vmem:[%s62] sm:$0xff]
  %64 = vst [vmem:[%s61] sm:$0xff] %v63
  %s65 = scalar_lea.vmem %s4, 40
  %s66 = scalar_lea.vmem %s1, 40
  %v67 = vld [vmem:[%s66] sm:$0xff]
  %68 = vst [vmem:[%s65] sm:$0xff] %v67
  %s69 = scalar_lea.vmem %s4, 48
  %s70 = scalar_lea.vmem %s1, 48
  %v71 = vld [vmem:[%s70] sm:$0xff]
  %72 = vst [vmem:[%s69] sm:$0xff] %v71
  %s73 = scalar_lea.vmem %s4, 56
  %s74 = scalar_lea.vmem %s1, 56
  %v75 = vld [vmem:[%s74] sm:$0xff]
  %76 = vst [vmem:[%s73] sm:$0xff] %v75
  %s77 = scalar_lea.vmem %s4, 64
  %s78 = scalar_lea.vmem %s1, 64
  %v79 = vld [vmem:[%s78] sm:$0xff]
  %80 = vst [vmem:[%s77] sm:$0xff] %v79
  %s81 = scalar_lea.vmem %s4, 72
  %s82 = scalar_lea.vmem %s1, 72
  %v83 = vld [vmem:[%s82] sm:$0xff]
  %84 = vst [vmem:[%s81] sm:$0xff] %v83
  %s85 = scalar_lea.vmem %s4, 80
  %s86 = scalar_lea.vmem %s1, 80
  %v87 = vld [vmem:[%s86] sm:$0xff]
  %88 = vst [vmem:[%s85] sm:$0xff] %v87

// kernel: _hadamard_apply.1
$region0: #{_hadamard_apply.1}
  #allocation0 [shape = 'u32[]', space=smem, size = 0x4, offset = 0x4, fixed_abs, tag = 'smem constant byte address 0x4 - core index']
  #allocation1 [shape = 'u32[144,128]{1,0:T(1,128)}', space=vmem, size = 0x12000, scoped, tag = 'internal scratch']
  %s0 = inlined_call_operand.vmem [shape: f32[88,256], index: 0, kind: input, shape index: {}]
  %s1 = inlined_call_operand.vmem [shape: f32[128,128], index: 1, kind: input, shape index: {}]
  %s2 = inlined_call_operand.vmem [shape: f32[88,128], index: 2, kind: output, shape index: {}]
  %s3 = sld [smem:[#allocation0]]
  $region22: #{_hadamard_apply.1} parent=0
    _
  %s5 = ssub.s32 1, %s3
  %s6 = scalar_select 0, %s5, %s3
  // Predicated region
  $region2: #{_hadamard_apply.1} parent=0 // pred_check
    _
  $region3: #{_hadamard_apply.1} parent=0 // pred_check_branch
    %8 = sbr.rel (0) target = $region5
  $region4: #{_hadamard_apply.1} parent=0 // pred_region
    _
  $region5: #{_hadamard_apply.1} parent=0 // pred_fallthru
    _
  // Predicated region
  $region6: #{_hadamard_apply.1} parent=0 // pred_check
    _
  $region7: #{_hadamard_apply.1} parent=0 // pred_check_branch
    %10 = sbr.rel (0) target = $region9
  $region8: #{_hadamard_apply.1} parent=0 // pred_region
    _
  $region9: #{_hadamard_apply.1} parent=0 // pred_fallthru
    _
  %p11 = scmp.eq.s32.totalorder 0, 0
  // Predicated region
  $region10: #{_hadamard_apply.1} parent=0 // pred_check
    %p12 = pneg %p11
  $region11: #{_hadamard_apply.1} parent=0 // pred_check_branch
    %14 = sbr.rel (%p12) target = $region13
  $region12: #{_hadamard_apply.1} parent=0 // pred_region
    %15 = vst [vmem:[%s2] sm:$0xff] 0.0
    %16 = vst [vmem:[%s2 + $0x8] sm:$0xff] 0.0
    %17 = vst [vmem:[%s2 + $0x10] sm:$0xff] 0.0
    %18 = vst [vmem:[%s2 + $0x18] sm:$0xff] 0.0
    %19 = vst [vmem:[%s2 + $0x20] sm:$0xff] 0.0
    %20 = vst [vmem:[%s2 + $0x28] sm:$0xff] 0.0
    %21 = vst [vmem:[%s2 + $0x30] sm:$0xff] 0.0
    %22 = vst [vmem:[%s2 + $0x38] sm:$0xff] 0.0
    %23 = vst [vmem:[%s2 + $0x40] sm:$0xff] 0.0
    %24 = vst [vmem:[%s2 + $0x48] sm:$0xff] 0.0
    %25 = vst [vmem:[%s2 + $0x50] sm:$0xff] 0.0
  $region13: #{_hadamard_apply.1} parent=0 // pred_fallthru
    _
  %v26 = vld [vmem:[%s1] sm:$0xff]
  %v27 = vld [vmem:[%s1 + $0x8] sm:$0xff]
  %v28 = vld [vmem:[%s1 + $0x10] sm:$0xff]
  %v29 = vld [vmem:[%s1 + $0x18] sm:$0xff]
  %v30 = vld [vmem:[%s1 + $0x20] sm:$0xff]
  %v31 = vld [vmem:[%s1 + $0x28] sm:$0xff]
  %v32 = vld [vmem:[%s1 + $0x30] sm:$0xff]
  %v33 = vld [vmem:[%s1 + $0x38] sm:$0xff]
  %v34 = vld [vmem:[%s1 + $0x40] sm:$0xff]
  %v35 = vld [vmem:[%s1 + $0x48] sm:$0xff]
  %v36 = vld [vmem:[%s1 + $0x50] sm:$0xff]
  %v37 = vld [vmem:[%s1 + $0x58] sm:$0xff]
  %v38 = vld [vmem:[%s1 + $0x60] sm:$0xff]
  %v39 = vld [vmem:[%s1 + $0x68] sm:$0xff]
  %v40 = vld [vmem:[%s1 + $0x70] sm:$0xff]
  %v41 = vld [vmem:[%s1 + $0x78] sm:$0xff]
  %42 = vrot.lane.b32.xlu0 %v26, 64
  %v43 = vpop.permute.xlu0 %42
  %44 = vrot.lane.b32.xlu0 %v27, 64
  %v45 = vpop.permute.xlu0 %44
  %46 = vrot.lane.b32.xlu0 %v28, 64
  %v47 = vpop.permute.xlu0 %46
  %48 = vrot.lane.b32.xlu0 %v29, 64
  %v49 = vpop.permute.xlu0 %48
  %50 = vrot.lane.b32.xlu0 %v30, 64
  %v51 = vpop.permute.xlu0 %50
  %52 = vrot.lane.b32.xlu0 %v31, 64
  %v53 = vpop.permute.xlu0 %52
  %54 = vrot.lane.b32.xlu0 %v32, 64
  %v55 = vpop.permute.xlu0 %54
  %56 = vrot.lane.b32.xlu0 %v33, 64
  %v57 = vpop.permute.xlu0 %56
  %58 = vrot.lane.b32.xlu0 %v34, 64
  %v59 = vpop.permute.xlu0 %58
  %60 = vrot.lane.b32.xlu0 %v35, 64
  %v61 = vpop.permute.xlu0 %60
  %62 = vrot.lane.b32.xlu0 %v36, 64
  %v63 = vpop.permute.xlu0 %62
  %64 = vrot.lane.b32.xlu0 %v37, 64
  %v65 = vpop.permute.xlu0 %64
  %66 = vrot.lane.b32.xlu0 %v38, 64
  %v67 = vpop.permute.xlu0 %66
  %68 = vrot.lane.b32.xlu0 %v39, 64
  %v69 = vpop.permute.xlu0 %68
  %70 = vrot.lane.b32.xlu0 %v40, 64
  %v71 = vpop.permute.xlu0 %70
  %72 = vrot.lane.b32.xlu0 %v41, 64
  %v73 = vpop.permute.xlu0 %72
  %v74 = vlaneseq
  %v75 = vand.u32 %v74, 127
  %vm76 = vcmp.lt.s32.totalorder %v75, 64
  %v77 = vsub.f32 0.0, %v43
  %v78 = vsub.f32 0.0, %v45
  %v79 = vsub.f32 0.0, %v47
  %v80 = vsub.f32 0.0, %v49
  %v81 = vsub.f32 0.0, %v51
  %v82 = vsub.f32 0.0, %v53
  %v83 = vsub.f32 0.0, %v55
  %v84 = vsub.f32 0.0, %v57
  %v85 = vsub.f32 0.0, %v59
  %v86 = vsub.f32 0.0, %v61
  %v87 = vsub.f32 0.0, %v63
  %v88 = vsub.f32 0.0, %v65
  %v89 = vsub.f32 0.0, %v67
  %v90 = vsub.f32 0.0, %v69
  %v91 = vsub.f32 0.0, %v71
  %v92 = vsub.f32 0.0, %v73
  %v93 = vsel %vm76, %v77, %v43
  %v94 = vsel %vm76, %v78, %v45
  %v95 = vsel %vm76, %v79, %v47
  %v96 = vsel %vm76, %v80, %v49
  %v97 = vsel %vm76, %v81, %v51
  %v98 = vsel %vm76, %v82, %v53
  %v99 = vsel %vm76, %v83, %v55
  %v100 = vsel %vm76, %v84, %v57
  %v101 = vsel %vm76, %v85, %v59
  %v102 = vsel %vm76, %v86, %v61
  %v103 = vsel %vm76, %v87, %v63
  %v104 = vsel %vm76, %v88, %v65
  %v105 = vsel %vm76, %v89, %v67
  %v106 = vsel %vm76, %v90, %v69
  %v107 = vsel %vm76, %v91, %v71
  %v108 = vsel %vm76, %v92, %v73
  %v109 = vld [vmem:[%s2] sm:$0xff]
  %v110 = vld [vmem:[%s2 + $0x8] sm:$0xff]
  %v111 = vld [vmem:[%s2 + $0x10] sm:$0xff]
  %v112 = vld [vmem:[%s2 + $0x18] sm:$0xff]
  %v113 = vld [vmem:[%s2 + $0x20] sm:$0xff]
  %v114 = vld [vmem:[%s2 + $0x28] sm:$0xff]
  %v115 = vld [vmem:[%s2 + $0x30] sm:$0xff]
  %v116 = vld [vmem:[%s2 + $0x38] sm:$0xff]
  %v117 = vld [vmem:[%s2 + $0x40] sm:$0xff]
  %v118 = vld [vmem:[%s2 + $0x48] sm:$0xff]
  %v119 = vld [vmem:[%s2 + $0x50] sm:$0xff]
  %v120 = vld [vmem:[%s0] sm:$0xff]
  %v121 = vld [vmem:[%s0 + $0x8] sm:$0xff]
  %v122 = vld [vmem:[%s0 + $0x10] sm:$0xff]
  %v123 = vld [vmem:[%s0 + $0x18] sm:$0xff]
  %v124 = vld [vmem:[%s0 + $0x20] sm:$0xff]
  %v125 = vld [vmem:[%s0 + $0x28] sm:$0xff]
  %v126 = vld [vmem:[%s0 + $0x30] sm:$0xff]
  %v127 = vld [vmem:[%s0 + $0x38] sm:$0xff]
  %v128 = vld [vmem:[%s0 + $0x40] sm:$0xff]
  %v129 = vld [vmem:[%s0 + $0x48] sm:$0xff]
  %v130 = vld [vmem:[%s0 + $0x50] sm:$0xff]
  %v131 = vld [vmem:[%s0 + $0x58] sm:$0xff]
  %v132 = vld [vmem:[%s0 + $0x60] sm:$0xff]
  %v133 = vld [vmem:[%s0 + $0x68] sm:$0xff]
  %v134 = vld [vmem:[%s0 + $0x70] sm:$0xff]
  %v135 = vld [vmem:[%s0 + $0x78] sm:$0xff]
  %v136 = vld [vmem:[%s0 + $0x80] sm:$0xff]
  %v137 = vld [vmem:[%s0 + $0x88] sm:$0xff]
  %v138 = vld [vmem:[%s0 + $0x90] sm:$0xff]
  %v139 = vld [vmem:[%s0 + $0x98] sm:$0xff]
  %v140 = vld [vmem:[%s0 + $0xa0] sm:$0xff]
  %v141 = vld [vmem:[%s0 + $0xa8] sm:$0xff]
  %142 = vmatprep.subr.mxu0 0.0
  %143 = vmatpush1.msra.mxu0 %v26
  %144 = vmatprep.subr.mxu0 0.0
  %145 = vmatpush1.msra.mxu0 %v27
  %146 = vmatprep.subr.mxu0 0.0
  %147 = vmatpush1.msra.mxu0 %v28
  %148 = vmatprep.subr.mxu0 0.0
  %149 = vmatpush1.msra.mxu0 %v29
  %150 = vmatprep.subr.mxu0 0.0
  %151 = vmatpush1.msra.mxu0 %v30
  %152 = vmatprep.subr.mxu0 0.0
  %153 = vmatpush1.msra.mxu0 %v31
  %154 = vmatprep.subr.mxu0 0.0
  %155 = vmatpush1.msra.mxu0 %v32
  %156 = vmatprep.subr.mxu0 0.0
  %157 = vmatpush1.msra.mxu0 %v33
  %158 = vmatprep.subr.mxu0 0.0
  %159 = vmatpush1.msra.mxu0 %v34
  %160 = vmatprep.subr.mxu0 0.0
  %161 = vmatpush1.msra.mxu0 %v35
  %162 = vmatprep.subr.mxu0 0.0
  %163 = vmatpush1.msra.mxu0 %v36
  %164 = vmatprep.subr.mxu0 0.0
  %165 = vmatpush1.msra.mxu0 %v37
  %166 = vmatprep.subr.mxu0 0.0
  %167 = vmatpush1.msra.mxu0 %v38
  %168 = vmatprep.subr.mxu0 0.0
  %169 = vmatpush1.msra.mxu0 %v39
  %170 = vmatprep.subr.mxu0 0.0
  %171 = vmatpush1.msra.mxu0 %v40
  %172 = vmatprep.subr.mxu0 0.0
  %173 = vmatpush1.msra.mxu0 %v41
  %174 = vmatprep.subr.mxu0 0.0
  %175 = vmatpush1.msra.mxu0 %v93
  %176 = vmatprep.subr.mxu0 0.0
  %177 = vmatpush1.msra.mxu0 %v94
  %178 = vmatprep.subr.mxu0 0.0
  %179 = vmatpush1.msra.mxu0 %v95
  %180 = vmatprep.subr.mxu0 0.0
  %181 = vmatpush1.msra.mxu0 %v96
  %182 = vmatprep.subr.mxu0 0.0
  %183 = vmatpush1.msra.mxu0 %v97
  %184 = vmatprep.subr.mxu0 0.0
  %185 = vmatpush1.msra.mxu0 %v98
  %186 = vmatprep.subr.mxu0 0.0
  %187 = vmatpush1.msra.mxu0 %v99
  %188 = vmatprep.subr.mxu0 0.0
  %189 = vmatpush1.msra.mxu0 %v100
  %190 = vmatprep.subr.mxu0 0.0
  %191 = vmatpush1.msra.mxu0 %v101
  %192 = vmatprep.subr.mxu0 0.0
  %193 = vmatpush1.msra.mxu0 %v102
  %194 = vmatprep.subr.mxu0 0.0
  %195 = vmatpush1.msra.mxu0 %v103
  %196 = vmatprep.subr.mxu0 0.0
  %197 = vmatpush1.msra.mxu0 %v104
  %198 = vmatprep.subr.mxu0 0.0
  %199 = vmatpush1.msra.mxu0 %v105
  %200 = vmatprep.subr.mxu0 0.0
  %201 = vmatpush1.msra.mxu0 %v106
  %202 = vmatprep.subr.mxu0 0.0
  %203 = vmatpush1.msra.mxu0 %v107
  %204 = vmatprep.subr.mxu0 0.0
  %205 = vmatpush1.msra.mxu0 %v108
  %206 = vmatprep.mubr.f32.mxu0 %v121
  %207 = vmatmul.mubr.f32.gmra.mrb[0].mxu0 %v120
  %v208 = vpop.f32.mrb[0].mxu0
  %v209 = vadd.f32 0.0, %v208
  %v210 = vpop.f32.mrb[0].mxu0
  %211 = vmatprep.mubr.f32.mxu0 %v123
  %212 = vmatmul.mubr.f32.gmra.mrb[0].mxu0 %v122
  %v213 = vpop.f32.mrb[0].mxu0
  %v214 = vadd.f32 0.0, %v213
  %v215 = vpop.f32.mrb[0].mxu0
  %216 = vmatprep.mubr.f32.mxu0 %v125
  %217 = vmatmul.mubr.f32.gmra.mrb[0].mxu0 %v124
  %v218 = vpop.f32.mrb[0].mxu0
  %v219 = vadd.f32 0.0, %v218
  %v220 = vpop.f32.mrb[0].mxu0
  %221 = vmatprep.mubr.f32.mxu0 %v127
  %222 = vmatmul.mubr.f32.gmra.mrb[0].mxu0 %v126
  %v223 = vpop.f32.mrb[0].mxu0
  %v224 = vadd.f32 0.0, %v223
  %v225 = vpop.f32.mrb[0].mxu0
  %226 = vmatprep.mubr.f32.mxu0 %v129
  %227 = vmatmul.mubr.f32.gmra.mrb[0].mxu0 %v128
  %v228 = vpop.f32.mrb[0].mxu0
  %v229 = vadd.f32 0.0, %v228
  %v230 = vpop.f32.mrb[0].mxu0
  %231 = vmatprep.mubr.f32.mxu0 %v131
  %232 = vmatmul.mubr.f32.gmra.mrb[0].mxu0 %v130
  %v233 = vpop.f32.mrb[0].mxu0
  %v234 = vadd.f32 0.0, %v233
  %v235 = vpop.f32.mrb[0].mxu0
  %236 = vmatprep.mubr.f32.mxu0 %v133
  %237 = vmatmul.mubr.f32.gmra.mrb[0].mxu0 %v132
  %v238 = vpop.f32.mrb[0].mxu0
  %v239 = vadd.f32 0.0, %v238
  %v240 = vpop.f32.mrb[0].mxu0
  %241 = vmatprep.mubr.f32.mxu0 %v135
  %242 = vmatmul.mubr.f32.gmra.mrb[0].mxu0 %v134
  %v243 = vpop.f32.mrb[0].mxu0
  %v244 = vadd.f32 0.0, %v243
  %v245 = vpop.f32.mrb[0].mxu0
  %246 = vmatprep.mubr.f32.mxu0 %v137
  %247 = vmatmul.mubr.f32.gmra.mrb[0].mxu0 %v136
  %v248 = vpop.f32.mrb[0].mxu0
  %v249 = vadd.f32 0.0, %v248
  %v250 = vpop.f32.mrb[0].mxu0
  %251 = vmatprep.mubr.f32.mxu0 %v139
  %252 = vmatmul.mubr.f32.gmra.mrb[0].mxu0 %v138
  %v253 = vpop.f32.mrb[0].mxu0
  %v254 = vadd.f32 0.0, %v253
  %v255 = vpop.f32.mrb[0].mxu0
  %256 = vmatprep.mubr.f32.mxu0 %v141
  %257 = vmatmul.mubr.f32.gmra.mrb[0].mxu0 %v140
  %v258 = vpop.f32.mrb[0].mxu0
  %v259 = vadd.f32 0.0, %v258
  %v260 = vpop.f32.mrb[0].mxu0
  %261 = vdwg.mxu0
  %v262 = vadd.f32 %v109, %v209
  %v263 = vadd.f32 %v110, %v214
  %v264 = vadd.f32 %v111, %v219
  %v265 = vadd.f32 %v112, %v224
  %v266 = vadd.f32 %v113, %v229
  %v267 = vadd.f32 %v114, %v234
  %v268 = vadd.f32 %v115, %v239
  %v269 = vadd.f32 %v116, %v244
  %v270 = vadd.f32 %v117, %v249
  %v271 = vadd.f32 %v118, %v254
  %v272 = vadd.f32 %v119, %v259
  %273 = vst [vmem:[%s2] sm:$0xff] %v262
  %274 = vst [vmem:[%s2 + $0x8] sm:$0xff] %v263
  %275 = vst [vmem:[%s2 + $0x10] sm:$0xff] %v264
  %276 = vst [vmem:[%s2 + $0x18] sm:$0xff] %v265
  %277 = vst [vmem:[%s2 + $0x20] sm:$0xff] %v266
  %278 = vst [vmem:[%s2 + $0x28] sm:$0xff] %v267
  %279 = vst [vmem:[%s2 + $0x30] sm:$0xff] %v268
  %280 = vst [vmem:[%s2 + $0x38] sm:$0xff] %v269
  %281 = vst [vmem:[%s2 + $0x40] sm:$0xff] %v270
  %282 = vst [vmem:[%s2 + $0x48] sm:$0xff] %v271
  %283 = vst [vmem:[%s2 + $0x50] sm:$0xff] %v272
  // Predicated region
  $region14: #{_hadamard_apply.1} parent=0 // pred_check
    _
  $region15: #{_hadamard_apply.1} parent=0 // pred_check_branch
    %285 = sbr.rel (0) target = $region17
  $region16: #{_hadamard_apply.1} parent=0 // pred_region
    _
  $region17: #{_hadamard_apply.1} parent=0 // pred_fallthru
    _
  // Predicated region
  $region18: #{_hadamard_apply.1} parent=0 // pred_check
    _
  $region19: #{_hadamard_apply.1} parent=0 // pred_check_branch
    %287 = sbr.rel (0) target = $region21
  $region20: #{_hadamard_apply.1} parent=0 // pred_region
    _
  $region21: #{_hadamard_apply.1} parent=0 // pred_fallthru
    _

</llo_original>
